<compile_context>
chip_gen: v6e
topology: v6e:2x2x1
jax: 0.10.0
libtpu: 0.0.40
codegen_flags: <defaults>
</compile_context>

<pallas_src>
import functools

import jax
import jax.numpy as jnp
import numpy as np
from jax.experimental import pallas as pl
from jax.experimental.pallas import tpu as pltpu


def _round_up(x: int, m: int) -> int:
    return ((x + m - 1) // m) * m


# --------------------------------------------------------------------------
# Kernel
# --------------------------------------------------------------------------
def _mlp_softmax_kernel(x_ref, w_ref, b_ref, out_ref, xpad_ref, *,
                        n_layers: int, s_dim: int, exact_softmax: bool):
    # x_ref:    (TB, s_dim)    bf16  batch tile of states (no lane padding)
    # w_ref:    (L+2, P, P)    bf16  packed weights: [fc_in, fc_n..., fc_out]
    # b_ref:    (L+2, 1, P)    f32   packed biases (fc_out pad lanes = -1e30)
    # out_ref:  (TB, P)        f32   softmax (padded lanes are exactly 0)
    # xpad_ref: (TB, P)        bf16  VMEM scratch for the padded LHS tile

    # Build the 128-lane padded input tile in VMEM.  Padded lanes must be zero
    # so the zero-padded weight rows contribute nothing.
    xpad_ref[...] = jnp.zeros_like(xpad_ref)
    xpad_ref[:, :s_dim] = x_ref[...]

    # fc_in + ReLU, then the hidden stack.  Padded hidden lanes stay exactly
    # zero (zero weight rows/cols, zero biases).  MXU runs bf16 x bf16 -> f32.
    h = jnp.dot(xpad_ref[...], w_ref[0], preferred_element_type=jnp.float32)
    h = jnp.maximum(h + b_ref[0], 0.0)
    for i in range(1, n_layers + 1):
        h = jnp.dot(h.astype(jnp.bfloat16), w_ref[i],
                    preferred_element_type=jnp.float32)
        h = jnp.maximum(h + b_ref[i], 0.0)

    # fc_out (no ReLU).  The packed fc_out bias holds -1e30 on the padded
    # action lanes, so exp() drives them to exactly 0 — no iota / mask needed.
    logits = jnp.dot(h.astype(jnp.bfloat16), w_ref[n_layers + 1],
                     preferred_element_type=jnp.float32) + b_ref[n_layers + 1]

    m = jnp.max(logits, axis=1, keepdims=True)
    e = jnp.exp(logits - m)
    s = jnp.sum(e, axis=1, keepdims=True)
    if exact_softmax:
        out_ref[...] = e / s
    else:
        out_ref[...] = e * pl.reciprocal(s, approx=True)


# --------------------------------------------------------------------------
# Parameter init + one-time packing (outside the hot path)
# --------------------------------------------------------------------------
def init_params(key, s_dim, h_dim, a_dim, num_layers):
    """PyTorch-style uniform(+-1/sqrt(fan_in)) init; weights stored (in, out)."""
    params = {}

    def linear(k, fan_in, fan_out):
        kw, kb = jax.random.split(k)
        bound = 1.0 / np.sqrt(fan_in)
        w = jax.random.uniform(kw, (fan_in, fan_out), jnp.float32, -bound, bound)
        b = jax.random.uniform(kb, (fan_out,), jnp.float32, -bound, bound)
        return w, b

    keys = jax.random.split(key, num_layers + 2)
    params["w_in"], params["b_in"] = linear(keys[0], s_dim, h_dim)
    wn, bn = [], []
    for i in range(num_layers):
        w, b = linear(keys[1 + i], h_dim, h_dim)
        wn.append(w)
        bn.append(b)
    params["w_n"] = (jnp.stack(wn) if num_layers > 0
                     else jnp.zeros((0, h_dim, h_dim), jnp.float32))
    params["b_n"] = (jnp.stack(bn) if num_layers > 0
                     else jnp.zeros((0, h_dim), jnp.float32))
    params["w_out"], params["b_out"] = linear(keys[-1], h_dim, a_dim)
    return params


def prepare_params(params, *, s_dim, h_dim, a_dim, num_layers):
    """Pad + pack all weights/biases ONCE.

    Returns (w_packed bf16 (L+2,P,P), b_packed f32 (L+2,1,P)).
    The padded action lanes of the fc_out bias are set to -1e30 so the softmax
    mask is baked into the data (padded weight cols are zero, so padded logits
    equal that bias and exp() gives exactly 0).
    """
    P = _round_up(max(s_dim, h_dim, a_dim), 128)
    L = num_layers + 2  # fc_in, num_layers hidden, fc_out

    w = jnp.zeros((L, P, P), jnp.float32)
    b = jnp.zeros((L, 1, P), jnp.float32)

    w = w.at[0, :s_dim, :h_dim].set(params["w_in"])
    b = b.at[0, 0, :h_dim].set(params["b_in"])
    for i in range(num_layers):
        w = w.at[1 + i, :h_dim, :h_dim].set(params["w_n"][i])
        b = b.at[1 + i, 0, :h_dim].set(params["b_n"][i])
    w = w.at[num_layers + 1, :h_dim, :a_dim].set(params["w_out"])
    b = b.at[num_layers + 1, 0, :a_dim].set(params["b_out"])
    # Bake the action-axis softmax mask into the fc_out bias.
    b = b.at[num_layers + 1, 0, a_dim:].set(-1e30)

    return w.astype(jnp.bfloat16), b


# --------------------------------------------------------------------------
# Forward
# --------------------------------------------------------------------------
def global_net_p_forward(w_packed, b_packed, states, *, a_dim,
                         min_tiles: int = 1, exact_softmax: bool = False):
    """Pallas GlobalNet_p.forward.

    states: (s_dim,) (module semantics, softmax over the action axis) or
            (B, s_dim) for a vectorized batch (softmax per row).
    min_tiles: set to 2 on v7x for large batches so both TensorCores get work;
               leave at 1 on single-TC chips (v5e/v6e) for fewest grid steps.
    """
    single = states.ndim == 1
    if single:
        states = states[None, :]
    B, s_dim = states.shape

    n_layers = int(w_packed.shape[0]) - 2
    P = int(w_packed.shape[-1])

    # Batch tiling: multiple of 16 (bf16 sublane packing), cap 512 so large
    # batches take few pipeline steps; weights stay resident so VMEM is tiny.
    TB_CAP = 512
    TB = min(_round_up(B, 16), TB_CAP)
    if min_tiles > 1:
        TB = min(TB, _round_up(max((B + min_tiles - 1) // min_tiles, 1), 16))
    B_pad = _round_up(B, TB)
    grid = (B_pad // TB,)

    # Only tiny batch-row padding per call; NO lane padding (done in-kernel).
    x = states.astype(jnp.bfloat16)
    if B_pad != B:
        x = jnp.pad(x, ((0, B_pad - B), (0, 0)))

    flops = 2 * B_pad * P * P * (n_layers + 2)
    bytes_accessed = (w_packed.size * 2 + b_packed.size * 4
                      + x.size * 2 + B_pad * P * 4)
    cost = pl.CostEstimate(flops=flops, transcendentals=B_pad * P,
                           bytes_accessed=bytes_accessed)

    kernel = functools.partial(_mlp_softmax_kernel, n_layers=n_layers,
                               s_dim=s_dim, exact_softmax=exact_softmax)

    out_p = pl.pallas_call(
        kernel,
        out_shape=jax.ShapeDtypeStruct((B_pad, P), jnp.float32),
        grid_spec=pltpu.PrefetchScalarGridSpec(
            num_scalar_prefetch=0,
            grid=grid,
            in_specs=[
                pl.BlockSpec((TB, s_dim), lambda i: (i, 0)),            # states
                pl.BlockSpec(w_packed.shape, lambda i: (0, 0, 0)),      # weights (resident)
                pl.BlockSpec(b_packed.shape, lambda i: (0, 0, 0)),      # biases  (resident)
            ],
            out_specs=pl.BlockSpec((TB, P), lambda i: (i, 0)),
            scratch_shapes=[pltpu.VMEM((TB, P), jnp.bfloat16)],          # padded LHS tile
        ),
        compiler_params=pltpu.CompilerParams(
            dimension_semantics=("parallel",)),   # shards batch tiles on v7x
        cost_estimate=cost,
    )(x, w_packed, b_packed)

    out = out_p[:B, :a_dim]
    return out[0] if single else out


# --------------------------------------------------------------------------
# Pure-JAX reference (f32) for correctness checking
# --------------------------------------------------------------------------
def _reference_forward(params, state, num_layers):
    h = jnp.maximum(state.astype(jnp.float32) @ params["w_in"] + params["b_in"], 0.0)
    for i in range(num_layers):
        h = jnp.maximum(h @ params["w_n"][i] + params["b_n"][i], 0.0)
    logits = h @ params["w_out"] + params["b_out"]
    return jax.nn.softmax(logits, axis=0)


if __name__ == "__main__":
    # MountainCar-like A3C shapes implied by the module: tiny state, few actions.
    s_dim, h_dim, a_dim, num_layers = 2, 32, 3, 2
    batch = 8

    key = jax.random.PRNGKey(0)
    k_params, k_state = jax.random.split(key)
    params = init_params(k_params, s_dim, h_dim, a_dim, num_layers)
    states = jax.random.normal(k_state, (batch, s_dim), jnp.float32)

    # One-time packing (outside the hot path).
    w_p, b_p = jax.block_until_ready(
        prepare_params(params, s_dim=s_dim, h_dim=h_dim, a_dim=a_dim,
                       num_layers=num_layers))

    fwd = jax.jit(functools.partial(global_net_p_forward, a_dim=a_dim))

    out_batch = jax.block_until_ready(fwd(w_p, b_p, states))       # (B, a_dim)
    out_single = jax.block_until_ready(fwd(w_p, b_p, states[0]))   # (a_dim,) module semantics

    ref_batch = jax.block_until_ready(
        jax.vmap(lambda s: _reference_forward(params, s, num_layers))(states))

    # bf16 weights + approx reciprocal -> relaxed tolerance vs f32 reference.
    np.testing.assert_allclose(np.asarray(out_batch), np.asarray(ref_batch),
                               rtol=2e-2, atol=2e-2)
    np.testing.assert_allclose(np.asarray(out_single), np.asarray(ref_batch[0]),
                               rtol=2e-2, atol=2e-2)
    assert out_batch.shape == (batch, a_dim)
    assert out_single.shape == (a_dim,)

    print("KERNEL_OK")
</pallas_src>

<mosaic_0001>
module attributes {stable_mosaic.version = 11 : i64} {
  func.func @_mlp_softmax_kernel(%arg0: i32, %arg1: memref<16x2xbf16, #tpu.memory_space<vmem>>, %arg2: memref<4x128x128xbf16, #tpu.memory_space<vmem>>, %arg3: memref<4x1x128xf32, #tpu.memory_space<vmem>>, %arg4: memref<16x128xf32, #tpu.memory_space<vmem>>, %arg5: memref<16x128xbf16, #tpu.memory_space<vmem>>) attributes {dimension_semantics = [#tpu.dimension_semantics<parallel>], iteration_bounds = array<i64: 1>, scalar_prefetch = 0 : i64, scratch_operands = 1 : i64, tpu.core_type = #tpu.core_type<tc>, window_params = [{transform_indices = @transform_0, window_bounds = array<i64: 16, 2>}, {pipeline_mode = #tpu.pipeline_mode<synchronous>, transform_indices = @transform_1, window_bounds = array<i64: 4, 128, 128>}, {pipeline_mode = #tpu.pipeline_mode<synchronous>, transform_indices = @transform_2, window_bounds = array<i64: 4, 1, 128>}, {transform_indices = @transform_3, window_bounds = array<i64: 16, 128>}]} {
    %cst = arith.constant 0.000000e+00 : bf16
    %0 = vector.broadcast %cst : bf16 to vector<16x128xbf16>
    %c0 = arith.constant 0 : index
    %c0_0 = arith.constant 0 : index
    %1 = vector.load %arg5[%c0, %c0_0] : memref<16x128xbf16, #tpu.memory_space<vmem>>, vector<16x128xbf16>
    tpu.vector_store %arg5[%c0, %c0_0], %0 {strides = array<i32>} : memref<16x128xbf16, #tpu.memory_space<vmem>>, vector<16x128xbf16>,
    %c0_1 = arith.constant 0 : index
    %c0_2 = arith.constant 0 : index
    %2 = vector.load %arg1[%c0_1, %c0_2] : memref<16x2xbf16, #tpu.memory_space<vmem>>, vector<16x2xbf16>
    %c0_3 = arith.constant 0 : index
    %c0_4 = arith.constant 0 : index
    %3 = vector.load %arg5[%c0_3, %c0_4] : memref<16x128xbf16, #tpu.memory_space<vmem>>, vector<16x2xbf16>
    tpu.vector_store %arg5[%c0_3, %c0_4], %2 {strides = array<i32>} : memref<16x128xbf16, #tpu.memory_space<vmem>>, vector<16x2xbf16>,
    %c0_5 = arith.constant 0 : index
    %c0_6 = arith.constant 0 : index
    %4 = vector.load %arg5[%c0_5, %c0_6] : memref<16x128xbf16, #tpu.memory_space<vmem>>, vector<16x128xbf16>
    %c0_7 = arith.constant 0 : index
    %c0_8 = arith.constant 0 : index
    %c0_9 = arith.constant 0 : index
    %5 = vector.load %arg2[%c0_7, %c0_8, %c0_9] : memref<4x128x128xbf16, #tpu.memory_space<vmem>>, vector<1x128x128xbf16>
    %6 = vector.shape_cast %5 : vector<1x128x128xbf16> to vector<128x128xbf16>
    %cst_10 = arith.constant dense<0.000000e+00> : vector<16x128xf32>
    %7 = tpu.matmul %4, %6, %cst_10 {dimension_numbers = #tpu.dot_dimension_numbers<[1], [0], [0], [1], [0, 0, 1, 1], [], []>} : vector<16x128xbf16>, vector<128x128xbf16>, vector<16x128xf32> -> vector<16x128xf32>
    %c0_11 = arith.constant 0 : index
    %c0_12 = arith.constant 0 : index
    %c0_13 = arith.constant 0 : index
    %8 = vector.load %arg3[%c0_11, %c0_12, %c0_13] : memref<4x1x128xf32, #tpu.memory_space<vmem>>, vector<1x1x128xf32>
    %9 = vector.shape_cast %8 : vector<1x1x128xf32> to vector<1x128xf32>
    %10 = vector.broadcast %9 : vector<1x128xf32> to vector<16x128xf32>
    %11 = arith.addf %7, %10 : vector<16x128xf32>
    %cst_14 = arith.constant 0.000000e+00 : f32
    %12 = vector.broadcast %cst_14 : f32 to vector<16x128xf32>
    %13 = arith.maximumf %11, %12 : vector<16x128xf32>
    %14 = arith.truncf %13 : vector<16x128xf32> to vector<16x128xbf16>
    %c1 = arith.constant 1 : index
    %c0_15 = arith.constant 0 : index
    %c0_16 = arith.constant 0 : index
    %15 = vector.load %arg2[%c1, %c0_15, %c0_16] : memref<4x128x128xbf16, #tpu.memory_space<vmem>>, vector<1x128x128xbf16>
    %16 = vector.shape_cast %15 : vector<1x128x128xbf16> to vector<128x128xbf16>
    %cst_17 = arith.constant dense<0.000000e+00> : vector<16x128xf32>
    %17 = tpu.matmul %14, %16, %cst_17 {dimension_numbers = #tpu.dot_dimension_numbers<[1], [0], [0], [1], [0, 0, 1, 1], [], []>} : vector<16x128xbf16>, vector<128x128xbf16>, vector<16x128xf32> -> vector<16x128xf32>
    %c1_18 = arith.constant 1 : index
    %c0_19 = arith.constant 0 : index
    %c0_20 = arith.constant 0 : index
    %18 = vector.load %arg3[%c1_18, %c0_19, %c0_20] : memref<4x1x128xf32, #tpu.memory_space<vmem>>, vector<1x1x128xf32>
    %19 = vector.shape_cast %18 : vector<1x1x128xf32> to vector<1x128xf32>
    %20 = vector.broadcast %19 : vector<1x128xf32> to vector<16x128xf32>
    %21 = arith.addf %17, %20 : vector<16x128xf32>
    %cst_21 = arith.constant 0.000000e+00 : f32
    %22 = vector.broadcast %cst_21 : f32 to vector<16x128xf32>
    %23 = arith.maximumf %21, %22 : vector<16x128xf32>
    %24 = arith.truncf %23 : vector<16x128xf32> to vector<16x128xbf16>
    %c2 = arith.constant 2 : index
    %c0_22 = arith.constant 0 : index
    %c0_23 = arith.constant 0 : index
    %25 = vector.load %arg2[%c2, %c0_22, %c0_23] : memref<4x128x128xbf16, #tpu.memory_space<vmem>>, vector<1x128x128xbf16>
    %26 = vector.shape_cast %25 : vector<1x128x128xbf16> to vector<128x128xbf16>
    %cst_24 = arith.constant dense<0.000000e+00> : vector<16x128xf32>
    %27 = tpu.matmul %24, %26, %cst_24 {dimension_numbers = #tpu.dot_dimension_numbers<[1], [0], [0], [1], [0, 0, 1, 1], [], []>} : vector<16x128xbf16>, vector<128x128xbf16>, vector<16x128xf32> -> vector<16x128xf32>
    %c2_25 = arith.constant 2 : index
    %c0_26 = arith.constant 0 : index
    %c0_27 = arith.constant 0 : index
    %28 = vector.load %arg3[%c2_25, %c0_26, %c0_27] : memref<4x1x128xf32, #tpu.memory_space<vmem>>, vector<1x1x128xf32>
    %29 = vector.shape_cast %28 : vector<1x1x128xf32> to vector<1x128xf32>
    %30 = vector.broadcast %29 : vector<1x128xf32> to vector<16x128xf32>
    %31 = arith.addf %27, %30 : vector<16x128xf32>
    %cst_28 = arith.constant 0.000000e+00 : f32
    %32 = vector.broadcast %cst_28 : f32 to vector<16x128xf32>
    %33 = arith.maximumf %31, %32 : vector<16x128xf32>
    %34 = arith.truncf %33 : vector<16x128xf32> to vector<16x128xbf16>
    %c3 = arith.constant 3 : index
    %c0_29 = arith.constant 0 : index
    %c0_30 = arith.constant 0 : index
    %35 = vector.load %arg2[%c3, %c0_29, %c0_30] : memref<4x128x128xbf16, #tpu.memory_space<vmem>>, vector<1x128x128xbf16>
    %36 = vector.shape_cast %35 : vector<1x128x128xbf16> to vector<128x128xbf16>
    %cst_31 = arith.constant dense<0.000000e+00> : vector<16x128xf32>
    %37 = tpu.matmul %34, %36, %cst_31 {dimension_numbers = #tpu.dot_dimension_numbers<[1], [0], [0], [1], [0, 0, 1, 1], [], []>} : vector<16x128xbf16>, vector<128x128xbf16>, vector<16x128xf32> -> vector<16x128xf32>
    %c3_32 = arith.constant 3 : index
    %c0_33 = arith.constant 0 : index
    %c0_34 = arith.constant 0 : index
    %38 = vector.load %arg3[%c3_32, %c0_33, %c0_34] : memref<4x1x128xf32, #tpu.memory_space<vmem>>, vector<1x1x128xf32>
    %39 = vector.shape_cast %38 : vector<1x1x128xf32> to vector<1x128xf32>
    %40 = vector.broadcast %39 : vector<1x128xf32> to vector<16x128xf32>
    %41 = arith.addf %37, %40 : vector<16x128xf32>
    %cst_35 = arith.constant dense<0xFF800000> : vector<16xf32>
    %42 = vector.multi_reduction <maximumf>, %41, %cst_35 [1] : vector<16x128xf32> to vector<16xf32>
    %43 = vector.shape_cast %42 : vector<16xf32> to vector<16x1xf32>
    %44 = vector.broadcast %43 : vector<16x1xf32> to vector<16x128xf32>
    %45 = arith.subf %41, %44 : vector<16x128xf32>
    %46 = math.exp %45 : vector<16x128xf32>
    %cst_36 = arith.constant dense<0.000000e+00> : vector<16xf32>
    %47 = vector.multi_reduction <add>, %46, %cst_36 [1] : vector<16x128xf32> to vector<16xf32>
    %48 = vector.shape_cast %47 : vector<16xf32> to vector<16x1xf32>
    %49 = tpu.reciprocal %48 {approx = true} : vector<16x1xf32> -> vector<16x1xf32>
    %50 = vector.broadcast %49 : vector<16x1xf32> to vector<16x128xf32>
    %51 = arith.mulf %46, %50 : vector<16x128xf32>
    %c0_37 = arith.constant 0 : index
    %c0_38 = arith.constant 0 : index
    %52 = vector.load %arg4[%c0_37, %c0_38] : memref<16x128xf32, #tpu.memory_space<vmem>>, vector<16x128xf32>
    tpu.vector_store %arg4[%c0_37, %c0_38], %51 {strides = array<i32>} : memref<16x128xf32, #tpu.memory_space<vmem>>, vector<16x128xf32>,
    return
  }
  func.func @transform_0(%arg0: i32) -> (i32, i32) {
    %c0_i32 = arith.constant 0 : i32
    %c0_i32_0 = arith.constant 0 : i32
    return %arg0, %c0_i32 : i32, i32
  }
  func.func @transform_1(%arg0: i32) -> (i32, i32, i32) {
    %c0_i32 = arith.constant 0 : i32
    %c0_i32_0 = arith.constant 0 : i32
    %c0_i32_1 = arith.constant 0 : i32
    %c0_i32_2 = arith.constant 0 : i32
    return %c0_i32, %c0_i32_0, %c0_i32_1 : i32, i32, i32
  }
  func.func @transform_2(%arg0: i32) -> (i32, i32, i32) {
    %c0_i32 = arith.constant 0 : i32
    %c0_i32_0 = arith.constant 0 : i32
    %c0_i32_1 = arith.constant 0 : i32
    %c0_i32_2 = arith.constant 0 : i32
    return %c0_i32, %c0_i32_0, %c0_i32_1 : i32, i32, i32
  }
  func.func @transform_3(%arg0: i32) -> (i32, i32) {
    %c0_i32 = arith.constant 0 : i32
    %c0_i32_0 = arith.constant 0 : i32
    return %arg0, %c0_i32 : i32, i32
  }
}

</mosaic_0001>

<llo_original>
// kernel: global_net_p_forward.1
$region0: #{global_net_p_forward.1}
  #allocation0 [shape = 'u32[]', space=smem, size = 0x4, offset = 0x4, fixed_abs, tag = 'smem constant byte address 0x4 - core index']
  #allocation1 [shape = 'u32[144,128]{1,0:T(1,128)}', space=vmem, size = 0x12000, scoped, tag = 'internal scratch']
  #allocation2 [shape = 'bf16[16,128]{1,0:T(8,128)(2,1)}', space=vmem, size = 0x1000, scoped, tag = 'scratch operand']
  %s0 = inlined_call_operand.vmem [shape: bf16[16,2], index: 0, kind: input, shape index: {}]
  %s1 = inlined_call_operand.hbm [shape: bf16[4,128,128], index: 1, kind: input, shape index: {}]
  %s2 = inlined_call_operand.vmem [shape: f32[4,1,128], index: 2, kind: input, shape index: {}]
  %s3 = inlined_call_operand.vmem [shape: f32[16,128], index: 3, kind: output, shape index: {}]
  %s4 = sld [smem:[#allocation0]]
  $region26: #{global_net_p_forward.1} parent=0
    _
  %s6 = ssub.s32 1, %s4
  %s7 = scalar_select 0, %s6, %s4
  $region1: #{global_net_p_forward.1} parent=0
    #allocation3 [shape = 'u8[131072]{0}', space=vmem, size = 0x20000, scoped, tag = 'input window, operand 1, single buffered']
    #allocation4 [shape = 's32[1]{0}', space=sflag, size = 0x4, scoped, tag = 'scoped memory for global_net_p_forward.1']
    %8 = vsyncpa [#allocation4], 0
    // Predicated region
    $region2: #{global_net_p_forward.1} parent=1 // pred_check
      _
    $region3: #{global_net_p_forward.1} parent=1 // pred_check_branch
      %10 = sbr.rel (0) target = $region5
    $region4: #{global_net_p_forward.1} parent=1 // pred_region
      _
    $region5: #{global_net_p_forward.1} parent=1 // pred_fallthru
      _
    // Predicated region
    $region6: #{global_net_p_forward.1} parent=1 // pred_check
      _
    $region7: #{global_net_p_forward.1} parent=1 // pred_check_branch
      %12 = sbr.rel (0) target = $region9
    $region8: #{global_net_p_forward.1} parent=1 // pred_region
      %s14 = ssub.s32 4096, 4096
      %15 = vsyncadd [#allocation4], %s14
      %s16 = sshll.u32 [#allocation3], 4
      %s17 = int_to_ptr.vmem [resolvable:$true] %s16
      %22 = dma.hbm_to_vmem [thread:$0]  %s1, 4096, %s17, [#allocation4], 64, 64, 4
    $region9: #{global_net_p_forward.1} parent=1 // pred_fallthru
      _
    // Predicated region
    $region10: #{global_net_p_forward.1} parent=1 // pred_check
      _
    $region11: #{global_net_p_forward.1} parent=1 // pred_check_branch
      %24 = sbr.rel (0) target = $region13
    $region12: #{global_net_p_forward.1} parent=1 // pred_region
      _
    $region13: #{global_net_p_forward.1} parent=1 // pred_fallthru
      _
    // Predicated region
    $region14: #{global_net_p_forward.1} parent=1 // pred_check
      _
    $region15: #{global_net_p_forward.1} parent=1 // pred_check_branch
      %26 = sbr.rel (0) target = $region17
    $region16: #{global_net_p_forward.1} parent=1 // pred_region
      %27 = dma.done [#allocation4], 4096
    $region17: #{global_net_p_forward.1} parent=1 // pred_fallthru
      _
    %29 = vst [vmem:[#allocation2] sm:$0xf] 0
    %30 = vst [vmem:[#allocation2 + $0x4] sm:$0xf] 0
    %v31 = vld [vmem:[%s0] sm:$0xf]
    %v32 = vld [vmem:[%s0 + $0x4] sm:$0xf]
    %vm33 = vcmask 11264
    %34 = vst.msk [vmem:[#allocation2] sm:$0xf] %vm33, %v31
    %35 = vst.msk [vmem:[#allocation2 + $0x4] sm:$0xf] %vm33, %v32
    %v36 = vld [vmem:[#allocation2] sm:$0xf]
    %v37 = vld [vmem:[#allocation2 + $0x4] sm:$0xf]
    %v38 = vld [vmem:[#allocation3] sm:$0xf]
    %v39 = vld [vmem:[#allocation3 + $0x4] sm:$0xf]
    %v40 = vld [vmem:[#allocation3 + $0x8] sm:$0xf]
    %v41 = vld [vmem:[#allocation3 + $0xc] sm:$0xf]
    %v42 = vld [vmem:[#allocation3 + $0x10] sm:$0xf]
    %v43 = vld [vmem:[#allocation3 + $0x14] sm:$0xf]
    %v44 = vld [vmem:[#allocation3 + $0x18] sm:$0xf]
    %v45 = vld [vmem:[#allocation3 + $0x1c] sm:$0xf]
    %v46 = vld [vmem:[#allocation3 + $0x20] sm:$0xf]
    %v47 = vld [vmem:[#allocation3 + $0x24] sm:$0xf]
    %v48 = vld [vmem:[#allocation3 + $0x28] sm:$0xf]
    %v49 = vld [vmem:[#allocation3 + $0x2c] sm:$0xf]
    %v50 = vld [vmem:[#allocation3 + $0x30] sm:$0xf]
    %v51 = vld [vmem:[#allocation3 + $0x34] sm:$0xf]
    %v52 = vld [vmem:[#allocation3 + $0x38] sm:$0xf]
    %v53 = vld [vmem:[#allocation3 + $0x3c] sm:$0xf]
    %v54 = vld [vmem:[%s2] sm:$0x1]
    %v56 = vlaneseq
    %v57 = vshrl.u32 %v56, 7
    %v58 = vsub.s32 0, %v57
    %v59 = vrot.slane %v54, %v58
    %v63 = vunpack.c.l.b16 %v36
    %v64 = vunpack.c.l.b16 %v37
    %v65 = vpack.c.b16 %v64, %v63
    %v83 = vunpack.c.l.b16 %v38
    %v84 = vunpack.c.l.b16 %v39
    %v85 = vunpack.c.l.b16 %v40
    %v86 = vunpack.c.l.b16 %v41
    %v87 = vunpack.c.l.b16 %v42
    %v88 = vunpack.c.l.b16 %v43
    %v89 = vunpack.c.l.b16 %v44
    %v90 = vunpack.c.l.b16 %v45
    %v91 = vunpack.c.l.b16 %v46
    %v92 = vunpack.c.l.b16 %v47
    %v93 = vunpack.c.l.b16 %v48
    %v94 = vunpack.c.l.b16 %v49
    %v95 = vunpack.c.l.b16 %v50
    %v96 = vunpack.c.l.b16 %v51
    %v97 = vunpack.c.l.b16 %v52
    %v98 = vunpack.c.l.b16 %v53
    %v99 = vpack.c.b16 %v84, %v83
    %v100 = vpack.c.b16 %v86, %v85
    %v101 = vpack.c.b16 %v88, %v87
    %v102 = vpack.c.b16 %v90, %v89
    %v103 = vpack.c.b16 %v92, %v91
    %v104 = vpack.c.b16 %v94, %v93
    %v105 = vpack.c.b16 %v96, %v95
    %v106 = vpack.c.b16 %v98, %v97
    %115 = vmatprep.subr.bf16.mxu0 0
    %116 = vmatpush1.bf16.msra.mxu0 %v106
    %117 = vmatprep.subr.bf16.mxu0 0
    %118 = vmatpush1.bf16.msra.mxu0 %v105
    %119 = vmatprep.subr.bf16.mxu0 0
    %120 = vmatpush1.bf16.msra.mxu0 %v104
    %121 = vmatprep.subr.bf16.mxu0 0
    %122 = vmatpush1.bf16.msra.mxu0 %v103
    %123 = vmatprep.subr.bf16.mxu0 0
    %124 = vmatpush1.bf16.msra.mxu0 %v102
    %125 = vmatprep.subr.bf16.mxu0 0
    %126 = vmatpush1.bf16.msra.mxu0 %v101
    %127 = vmatprep.subr.bf16.mxu0 0
    %128 = vmatpush1.bf16.msra.mxu0 %v100
    %129 = vmatprep.subr.bf16.mxu0 0
    %130 = vmatpush1.bf16.msra.mxu0 %v99
    %131 = vmatprep.subr.bf16.mxu0 0
    %132 = vmatpush2.bf16.msra.mxu0 0
    %133 = vmatprep.subr.bf16.mxu0 0
    %134 = vmatpush2.bf16.msra.mxu0 0
    %135 = vmatprep.subr.bf16.mxu0 0
    %136 = vmatpush2.bf16.msra.mxu0 0
    %137 = vmatprep.subr.bf16.mxu0 0
    %138 = vmatpush2.bf16.msra.mxu0 0
    %139 = vmatprep.subr.bf16.mxu0 0
    %140 = vmatpush2.bf16.msra.mxu0 0
    %141 = vmatprep.subr.bf16.mxu0 0
    %142 = vmatpush2.bf16.msra.mxu0 0
    %143 = vmatprep.subr.bf16.mxu0 0
    %144 = vmatpush2.bf16.msra.mxu0 0
    %145 = vmatprep.subr.bf16.mxu0 0
    %146 = vmatpush2.bf16.msra.mxu0 0
    %147 = vmatprep.mubr.bf16.mxu0 0
    %148 = vmatmul.mubr.bf16.gmra.mxu0 %v65
    %v149 = vpop.f32.mrf.mxu0
    %v150 = vadd.f32 %v59, %v149
    %v151 = vpop.f32.mrf.mxu0
    %v152 = vpop.f32.mrf.mxu0
    %v153 = vadd.f32 %v59, %v152
    %v154 = vpop.f32.mrf.mxu0
    %155 = vdwg.mxu0
    %v156 = vmax.f32 %v150, 0.0
    %v157 = vmax.f32 %v153, 0.0
    %v158 = vpack.c.bf16 %v157, %v156
    %s159 = scalar_lea.vmem [#allocation3], 64
    %v160 = vld [vmem:[%s159] sm:$0xf]
    %v161 = vld [vmem:[%s159 + $0x4] sm:$0xf]
    %v162 = vld [vmem:[%s159 + $0x8] sm:$0xf]
    %v163 = vld [vmem:[%s159 + $0xc] sm:$0xf]
    %v164 = vld [vmem:[%s159 + $0x10] sm:$0xf]
    %v165 = vld [vmem:[%s159 + $0x14] sm:$0xf]
    %v166 = vld [vmem:[%s159 + $0x18] sm:$0xf]
    %v167 = vld [vmem:[%s159 + $0x1c] sm:$0xf]
    %v168 = vld [vmem:[%s159 + $0x20] sm:$0xf]
    %v169 = vld [vmem:[%s159 + $0x24] sm:$0xf]
    %v170 = vld [vmem:[%s159 + $0x28] sm:$0xf]
    %v171 = vld [vmem:[%s159 + $0x2c] sm:$0xf]
    %v172 = vld [vmem:[%s159 + $0x30] sm:$0xf]
    %v173 = vld [vmem:[%s159 + $0x34] sm:$0xf]
    %v174 = vld [vmem:[%s159 + $0x38] sm:$0xf]
    %v175 = vld [vmem:[%s159 + $0x3c] sm:$0xf]
    %s176 = scalar_lea.vmem %s2, 1
    %v177 = vld [vmem:[%s176] sm:$0x1]
    %v179 = vlaneseq
    %v180 = vshrl.u32 %v179, 7
    %v181 = vsub.s32 0, %v180
    %v182 = vrot.slane %v177, %v181
    %v200 = vunpack.c.l.b16 %v160
    %v201 = vunpack.c.l.b16 %v161
    %v202 = vunpack.c.l.b16 %v162
    %v203 = vunpack.c.l.b16 %v163
    %v204 = vunpack.c.l.b16 %v164
    %v205 = vunpack.c.l.b16 %v165
    %v206 = vunpack.c.l.b16 %v166
    %v207 = vunpack.c.l.b16 %v167
    %v208 = vunpack.c.l.b16 %v168
    %v209 = vunpack.c.l.b16 %v169
    %v210 = vunpack.c.l.b16 %v170
    %v211 = vunpack.c.l.b16 %v171
    %v212 = vunpack.c.l.b16 %v172
    %v213 = vunpack.c.l.b16 %v173
    %v214 = vunpack.c.l.b16 %v174
    %v215 = vunpack.c.l.b16 %v175
    %v216 = vpack.c.b16 %v201, %v200
    %v217 = vpack.c.b16 %v203, %v202
    %v218 = vpack.c.b16 %v205, %v204
    %v219 = vpack.c.b16 %v207, %v206
    %v220 = vpack.c.b16 %v209, %v208
    %v221 = vpack.c.b16 %v211, %v210
    %v222 = vpack.c.b16 %v213, %v212
    %v223 = vpack.c.b16 %v215, %v214
    %232 = vmatprep.subr.bf16.mxu0 0
    %233 = vmatpush1.bf16.msra.mxu0 %v223
    %234 = vmatprep.subr.bf16.mxu0 0
    %235 = vmatpush1.bf16.msra.mxu0 %v222
    %236 = vmatprep.subr.bf16.mxu0 0
    %237 = vmatpush1.bf16.msra.mxu0 %v221
    %238 = vmatprep.subr.bf16.mxu0 0
    %239 = vmatpush1.bf16.msra.mxu0 %v220
    %240 = vmatprep.subr.bf16.mxu0 0
    %241 = vmatpush1.bf16.msra.mxu0 %v219
    %242 = vmatprep.subr.bf16.mxu0 0
    %243 = vmatpush1.bf16.msra.mxu0 %v218
    %244 = vmatprep.subr.bf16.mxu0 0
    %245 = vmatpush1.bf16.msra.mxu0 %v217
    %246 = vmatprep.subr.bf16.mxu0 0
    %247 = vmatpush1.bf16.msra.mxu0 %v216
    %248 = vmatprep.subr.bf16.mxu0 0
    %249 = vmatpush2.bf16.msra.mxu0 0
    %250 = vmatprep.subr.bf16.mxu0 0
    %251 = vmatpush2.bf16.msra.mxu0 0
    %252 = vmatprep.subr.bf16.mxu0 0
    %253 = vmatpush2.bf16.msra.mxu0 0
    %254 = vmatprep.subr.bf16.mxu0 0
    %255 = vmatpush2.bf16.msra.mxu0 0
    %256 = vmatprep.subr.bf16.mxu0 0
    %257 = vmatpush2.bf16.msra.mxu0 0
    %258 = vmatprep.subr.bf16.mxu0 0
    %259 = vmatpush2.bf16.msra.mxu0 0
    %260 = vmatprep.subr.bf16.mxu0 0
    %261 = vmatpush2.bf16.msra.mxu0 0
    %262 = vmatprep.subr.bf16.mxu0 0
    %263 = vmatpush2.bf16.msra.mxu0 0
    %264 = vmatprep.mubr.bf16.mxu0 0
    %265 = vmatmul.mubr.bf16.gmra.mxu0 %v158
    %v266 = vpop.f32.mrf.mxu0
    %v267 = vadd.f32 %v182, %v266
    %v268 = vpop.f32.mrf.mxu0
    %v269 = vpop.f32.mrf.mxu0
    %v270 = vadd.f32 %v182, %v269
    %v271 = vpop.f32.mrf.mxu0
    %272 = vdwg.mxu0
    %v273 = vmax.f32 %v267, 0.0
    %v274 = vmax.f32 %v270, 0.0
    %v275 = vpack.c.bf16 %v274, %v273
    %s276 = scalar_lea.vmem [#allocation3], 128
    %v277 = vld [vmem:[%s276] sm:$0xf]
    %v278 = vld [vmem:[%s276 + $0x4] sm:$0xf]
    %v279 = vld [vmem:[%s276 + $0x8] sm:$0xf]
    %v280 = vld [vmem:[%s276 + $0xc] sm:$0xf]
    %v281 = vld [vmem:[%s276 + $0x10] sm:$0xf]
    %v282 = vld [vmem:[%s276 + $0x14] sm:$0xf]
    %v283 = vld [vmem:[%s276 + $0x18] sm:$0xf]
    %v284 = vld [vmem:[%s276 + $0x1c] sm:$0xf]
    %v285 = vld [vmem:[%s276 + $0x20] sm:$0xf]
    %v286 = vld [vmem:[%s276 + $0x24] sm:$0xf]
    %v287 = vld [vmem:[%s276 + $0x28] sm:$0xf]
    %v288 = vld [vmem:[%s276 + $0x2c] sm:$0xf]
    %v289 = vld [vmem:[%s276 + $0x30] sm:$0xf]
    %v290 = vld [vmem:[%s276 + $0x34] sm:$0xf]
    %v291 = vld [vmem:[%s276 + $0x38] sm:$0xf]
    %v292 = vld [vmem:[%s276 + $0x3c] sm:$0xf]
    %s293 = scalar_lea.vmem %s2, 2
    %v294 = vld [vmem:[%s293] sm:$0x1]
    %v296 = vlaneseq
    %v297 = vshrl.u32 %v296, 7
    %v298 = vsub.s32 0, %v297
    %v299 = vrot.slane %v294, %v298
    %v317 = vunpack.c.l.b16 %v277
    %v318 = vunpack.c.l.b16 %v278
    %v319 = vunpack.c.l.b16 %v279
    %v320 = vunpack.c.l.b16 %v280
    %v321 = vunpack.c.l.b16 %v281
    %v322 = vunpack.c.l.b16 %v282
    %v323 = vunpack.c.l.b16 %v283
    %v324 = vunpack.c.l.b16 %v284
    %v325 = vunpack.c.l.b16 %v285
    %v326 = vunpack.c.l.b16 %v286
    %v327 = vunpack.c.l.b16 %v287
    %v328 = vunpack.c.l.b16 %v288
    %v329 = vunpack.c.l.b16 %v289
    %v330 = vunpack.c.l.b16 %v290
    %v331 = vunpack.c.l.b16 %v291
    %v332 = vunpack.c.l.b16 %v292
    %v333 = vpack.c.b16 %v318, %v317
    %v334 = vpack.c.b16 %v320, %v319
    %v335 = vpack.c.b16 %v322, %v321
    %v336 = vpack.c.b16 %v324, %v323
    %v337 = vpack.c.b16 %v326, %v325
    %v338 = vpack.c.b16 %v328, %v327
    %v339 = vpack.c.b16 %v330, %v329
    %v340 = vpack.c.b16 %v332, %v331
    %349 = vmatprep.subr.bf16.mxu0 0
    %350 = vmatpush1.bf16.msra.mxu0 %v340
    %351 = vmatprep.subr.bf16.mxu0 0
    %352 = vmatpush1.bf16.msra.mxu0 %v339
    %353 = vmatprep.subr.bf16.mxu0 0
    %354 = vmatpush1.bf16.msra.mxu0 %v338
    %355 = vmatprep.subr.bf16.mxu0 0
    %356 = vmatpush1.bf16.msra.mxu0 %v337
    %357 = vmatprep.subr.bf16.mxu0 0
    %358 = vmatpush1.bf16.msra.mxu0 %v336
    %359 = vmatprep.subr.bf16.mxu0 0
    %360 = vmatpush1.bf16.msra.mxu0 %v335
    %361 = vmatprep.subr.bf16.mxu0 0
    %362 = vmatpush1.bf16.msra.mxu0 %v334
    %363 = vmatprep.subr.bf16.mxu0 0
    %364 = vmatpush1.bf16.msra.mxu0 %v333
    %365 = vmatprep.subr.bf16.mxu0 0
    %366 = vmatpush2.bf16.msra.mxu0 0
    %367 = vmatprep.subr.bf16.mxu0 0
    %368 = vmatpush2.bf16.msra.mxu0 0
    %369 = vmatprep.subr.bf16.mxu0 0
    %370 = vmatpush2.bf16.msra.mxu0 0
    %371 = vmatprep.subr.bf16.mxu0 0
    %372 = vmatpush2.bf16.msra.mxu0 0
    %373 = vmatprep.subr.bf16.mxu0 0
    %374 = vmatpush2.bf16.msra.mxu0 0
    %375 = vmatprep.subr.bf16.mxu0 0
    %376 = vmatpush2.bf16.msra.mxu0 0
    %377 = vmatprep.subr.bf16.mxu0 0
    %378 = vmatpush2.bf16.msra.mxu0 0
    %379 = vmatprep.subr.bf16.mxu0 0
    %380 = vmatpush2.bf16.msra.mxu0 0
    %381 = vmatprep.mubr.bf16.mxu0 0
    %382 = vmatmul.mubr.bf16.gmra.mxu0 %v275
    %v383 = vpop.f32.mrf.mxu0
    %v384 = vadd.f32 %v299, %v383
    %v385 = vpop.f32.mrf.mxu0
    %v386 = vpop.f32.mrf.mxu0
    %v387 = vadd.f32 %v299, %v386
    %v388 = vpop.f32.mrf.mxu0
    %389 = vdwg.mxu0
    %v390 = vmax.f32 %v384, 0.0
    %v391 = vmax.f32 %v387, 0.0
    %v392 = vpack.c.bf16 %v391, %v390
    %s393 = scalar_lea.vmem [#allocation3], 192
    %v394 = vld [vmem:[%s393] sm:$0xf]
    %v395 = vld [vmem:[%s393 + $0x4] sm:$0xf]
    %v396 = vld [vmem:[%s393 + $0x8] sm:$0xf]
    %v397 = vld [vmem:[%s393 + $0xc] sm:$0xf]
    %v398 = vld [vmem:[%s393 + $0x10] sm:$0xf]
    %v399 = vld [vmem:[%s393 + $0x14] sm:$0xf]
    %v400 = vld [vmem:[%s393 + $0x18] sm:$0xf]
    %v401 = vld [vmem:[%s393 + $0x1c] sm:$0xf]
    %v402 = vld [vmem:[%s393 + $0x20] sm:$0xf]
    %v403 = vld [vmem:[%s393 + $0x24] sm:$0xf]
    %v404 = vld [vmem:[%s393 + $0x28] sm:$0xf]
    %v405 = vld [vmem:[%s393 + $0x2c] sm:$0xf]
    %v406 = vld [vmem:[%s393 + $0x30] sm:$0xf]
    %v407 = vld [vmem:[%s393 + $0x34] sm:$0xf]
    %v408 = vld [vmem:[%s393 + $0x38] sm:$0xf]
    %v409 = vld [vmem:[%s393 + $0x3c] sm:$0xf]
    %s410 = scalar_lea.vmem %s2, 3
    %v411 = vld [vmem:[%s410] sm:$0x1]
    %v413 = vlaneseq
    %v414 = vshrl.u32 %v413, 7
    %v415 = vsub.s32 0, %v414
    %v416 = vrot.slane %v411, %v415
    %v434 = vunpack.c.l.b16 %v394
    %v435 = vunpack.c.l.b16 %v395
    %v436 = vunpack.c.l.b16 %v396
    %v437 = vunpack.c.l.b16 %v397
    %v438 = vunpack.c.l.b16 %v398
    %v439 = vunpack.c.l.b16 %v399
    %v440 = vunpack.c.l.b16 %v400
    %v441 = vunpack.c.l.b16 %v401
    %v442 = vunpack.c.l.b16 %v402
    %v443 = vunpack.c.l.b16 %v403
    %v444 = vunpack.c.l.b16 %v404
    %v445 = vunpack.c.l.b16 %v405
    %v446 = vunpack.c.l.b16 %v406
    %v447 = vunpack.c.l.b16 %v407
    %v448 = vunpack.c.l.b16 %v408
    %v449 = vunpack.c.l.b16 %v409
    %v450 = vpack.c.b16 %v435, %v434
    %v451 = vpack.c.b16 %v437, %v436
    %v452 = vpack.c.b16 %v439, %v438
    %v453 = vpack.c.b16 %v441, %v440
    %v454 = vpack.c.b16 %v443, %v442
    %v455 = vpack.c.b16 %v445, %v444
    %v456 = vpack.c.b16 %v447, %v446
    %v457 = vpack.c.b16 %v449, %v448
    %466 = vmatprep.subr.bf16.mxu0 0
    %467 = vmatpush1.bf16.msra.mxu0 %v457
    %468 = vmatprep.subr.bf16.mxu0 0
    %469 = vmatpush1.bf16.msra.mxu0 %v456
    %470 = vmatprep.subr.bf16.mxu0 0
    %471 = vmatpush1.bf16.msra.mxu0 %v455
    %472 = vmatprep.subr.bf16.mxu0 0
    %473 = vmatpush1.bf16.msra.mxu0 %v454
    %474 = vmatprep.subr.bf16.mxu0 0
    %475 = vmatpush1.bf16.msra.mxu0 %v453
    %476 = vmatprep.subr.bf16.mxu0 0
    %477 = vmatpush1.bf16.msra.mxu0 %v452
    %478 = vmatprep.subr.bf16.mxu0 0
    %479 = vmatpush1.bf16.msra.mxu0 %v451
    %480 = vmatprep.subr.bf16.mxu0 0
    %481 = vmatpush1.bf16.msra.mxu0 %v450
    %482 = vmatprep.subr.bf16.mxu0 0
    %483 = vmatpush2.bf16.msra.mxu0 0
    %484 = vmatprep.subr.bf16.mxu0 0
    %485 = vmatpush2.bf16.msra.mxu0 0
    %486 = vmatprep.subr.bf16.mxu0 0
    %487 = vmatpush2.bf16.msra.mxu0 0
    %488 = vmatprep.subr.bf16.mxu0 0
    %489 = vmatpush2.bf16.msra.mxu0 0
    %490 = vmatprep.subr.bf16.mxu0 0
    %491 = vmatpush2.bf16.msra.mxu0 0
    %492 = vmatprep.subr.bf16.mxu0 0
    %493 = vmatpush2.bf16.msra.mxu0 0
    %494 = vmatprep.subr.bf16.mxu0 0
    %495 = vmatpush2.bf16.msra.mxu0 0
    %496 = vmatprep.subr.bf16.mxu0 0
    %497 = vmatpush2.bf16.msra.mxu0 0
    %498 = vmatprep.mubr.bf16.mxu0 0
    %499 = vmatmul.mubr.bf16.gmra.mxu0 %v392
    %v500 = vpop.f32.mrf.mxu0
    %v501 = vadd.f32 %v416, %v500
    %v502 = vpop.f32.mrf.mxu0
    %v503 = vpop.f32.mrf.mxu0
    %v504 = vadd.f32 %v416, %v503
    %v505 = vpop.f32.mrf.mxu0
    %506 = vdwg.mxu0
    %507 = vmax.xlane.f32.xlu0 %v501
    %v508 = vpop.xlane.xlu0 %507
    %509 = vmax.xlane.f32.xlu0 %v504
    %v510 = vpop.xlane.xlu0 %509
    %v511 = vsub.f32 %v501, %v508
    %v512 = vsub.f32 %v504, %v510
    %v513 = vmul.f32 %v511, 1.442695
    %v514 = vpow.pop %v513
    %v515 = vmul.f32 %v512, 1.442695
    %v516 = vpow.pop %v515
    %517 = vadd.xlane.f32.xlu0 %v514
    %v518 = vpop.xlane.xlu0 %517
    %519 = vadd.xlane.f32.xlu0 %v516
    %v520 = vpop.xlane.xlu0 %519
    %v521 = vrcp.pop %v518
    %v522 = vrcp.pop %v520
    %v523 = vmul.f32 %v514, %v521
    %v524 = vmul.f32 %v516, %v522
    %525 = vst [vmem:[%s3] sm:$0xff] %v523
    %526 = vst [vmem:[%s3 + $0x8] sm:$0xff] %v524
    // Predicated region
    $region18: #{global_net_p_forward.1} parent=1 // pred_check
      _
    $region19: #{global_net_p_forward.1} parent=1 // pred_check_branch
      %528 = sbr.rel (0) target = $region21
    $region20: #{global_net_p_forward.1} parent=1 // pred_region
      _
    $region21: #{global_net_p_forward.1} parent=1 // pred_fallthru
      _
    // Predicated region
    $region22: #{global_net_p_forward.1} parent=1 // pred_check
      _
    $region23: #{global_net_p_forward.1} parent=1 // pred_check_branch
      %530 = sbr.rel (0) target = $region25
    $region24: #{global_net_p_forward.1} parent=1 // pred_region
      _
    $region25: #{global_net_p_forward.1} parent=1 // pred_fallthru
      _
    %531 = vsyncpa [#allocation4], 1

</llo_original>
